<compile_context>
chip_gen: v7x
topology: tpu7x:2x2x1
jax: 0.10.0
libtpu: 0.0.40
codegen_flags: <defaults>
</compile_context>

<pallas_src>
import jax
import jax.numpy as jnp
from jax.experimental import pallas as pl
from jax.experimental.pallas import tpu as pltpu


def _round_up(x, m):
    return ((x + m - 1) // m) * m


def _broadcast_kernel(m_ref, o_ref):
    # m_ref: (1, tN, 1)          sublane-major patch maxima for this row tile.
    # o_ref: (1, hblk, tN, N)    hblk = num_heads (folded) or 1 (per-head).
    # out[b, h, i, j] = patch_max[b, i]  -> pure head/lane broadcast, no relayout.
    o_ref[...] = jnp.broadcast_to(m_ref[...][:, None, :, :], o_ref.shape)


def map_reshape(map_x, patch_size, num_heads, *,
                vmem_out_budget_bytes=8 * 1024 * 1024):
    """JAX/Pallas equivalent of Map_reshape.forward.

    map_x: (B, S*p1, H*p2, W*p3) float array.
    Returns: (B, num_heads, N, N) with N = S*H*W and
             out[b, h, i, j] = max over patch i of map_x[b].
    """
    p1, p2, p3 = patch_size
    B, D, Hd, W = map_x.shape
    assert D % p1 == 0 and Hd % p2 == 0 and W % p3 == 0
    s, h, w = D // p1, Hd // p2, W // p3
    N = s * h * w

    dtype = map_x.dtype
    itemsize = jnp.dtype(dtype).itemsize

    # --- Glue (XLA): patch max without materializing the 7-D transpose.
    # 'b (s p1) (h p2) (w p3) -> b (s h w) (p1 p2 p3)' followed by max(-1)
    # is exactly a max over the intra-patch axes of the 7-D view.
    patch_max = map_x.reshape(B, s, p1, h, p2, w, p3).max(axis=(2, 4, 6))
    patch_max = patch_max.reshape(B, N, 1)   # rows on sublanes for the kernel

    # --- Tile selection ------------------------------------------------------
    sub = max(8, 32 // itemsize)        # sublane tile: 8 f32 / 16 bf16 / 32 i8
    n_lane = _round_up(N, 128)          # VMEM lane padding (budget math only)

    extra_vmem = None
    if N <= sub:
        # Tiny problem: one full-row block with heads folded in.
        tN, hblk = N, num_heads
    else:
        raw_folded = (vmem_out_budget_bytes
                      // (2 * num_heads * n_lane * itemsize) // sub) * sub
        if raw_folded >= sub:
            # Heads folded into the output block: patch_max DMA'd once per
            # row tile, larger per-step slabs.
            tN, hblk = min(N, raw_folded), num_heads
        else:
            # Folded slab would not fit: one head per step, heads innermost.
            raw = (vmem_out_budget_bytes // (2 * n_lane * itemsize) // sub) * sub
            tN, hblk = min(N, max(raw, sub)), 1
            # The max(raw, sub) clamp can exceed the budget for huge N; raise
            # the scoped-VMEM limit explicitly so lowering never OOMs.
            need = (2 * tN * n_lane * itemsize       # output double buffer
                    + 2 * tN * 128 * itemsize        # input double buffer
                    + (1 << 20))                     # headroom
            if need > vmem_out_budget_bytes:
                extra_vmem = need

    n_row_tiles = pl.cdiv(N, tN)

    out_shape = jax.ShapeDtypeStruct((B, num_heads, N, N), dtype)
    cost = pl.CostEstimate(
        flops=0,
        transcendentals=0,
        bytes_accessed=B * num_heads * N * N * itemsize + B * N * itemsize,
    )

    if hblk == num_heads:
        grid = (B, n_row_tiles)
        in_specs = [pl.BlockSpec((1, tN, 1), lambda b, i: (b, i, 0))]
        out_specs = pl.BlockSpec((1, num_heads, tN, N),
                                 lambda b, i: (b, 0, i, 0))
        sem = ("parallel", "parallel")
    else:
        # Heads innermost so the patch_max tile stays resident across heads.
        grid = (B, n_row_tiles, num_heads)
        in_specs = [pl.BlockSpec((1, tN, 1), lambda b, i, hh: (b, i, 0))]
        out_specs = pl.BlockSpec((1, 1, tN, N),
                                 lambda b, i, hh: (b, hh, i, 0))
        sem = ("parallel", "parallel", "parallel")

    return pl.pallas_call(
        _broadcast_kernel,
        out_shape=out_shape,
        grid=grid,
        in_specs=in_specs,
        out_specs=out_specs,
        compiler_params=pltpu.CompilerParams(
            dimension_semantics=sem,
            vmem_limit_bytes=extra_vmem,
        ),
        cost_estimate=cost,
    )(patch_max)


def _reference(map_x, patch_size, num_heads):
    """Pure-JAX reference mirroring the PyTorch forward."""
    p1, p2, p3 = patch_size
    B, D, Hd, W = map_x.shape
    s, h, w = D // p1, Hd // p2, W // p3
    N = s * h * w
    x = map_x.reshape(B, s, p1, h, p2, w, p3)
    x = jnp.transpose(x, (0, 1, 3, 5, 2, 4, 6)).reshape(B, N, p1 * p2 * p3)
    m = jnp.max(x, axis=-1)                               # (B, N)
    return jnp.broadcast_to(m[:, None, :, None], (B, num_heads, N, N))


if __name__ == "__main__":
    patch_size = (2, 2, 2)
    num_heads = 4
    key = jax.random.PRNGKey(0)

    # Test 1: tiny shape (N = 8 patches) — heads-folded, full-row block.
    map1 = jax.random.normal(key, (2, 4, 4, 4), dtype=jnp.float32)
    out1 = jax.block_until_ready(map_reshape(map1, patch_size, num_heads))
    ref1 = _reference(map1, patch_size, num_heads)
    assert out1.shape == ref1.shape, (out1.shape, ref1.shape)
    assert jnp.allclose(out1, ref1), "mismatch vs reference (test 1)"

    # Test 2: N = 256 (lane-aligned) — heads-folded, exact writeback, 1 MiB slab.
    map2 = jax.random.normal(key, (2, 8, 16, 16), dtype=jnp.float32)
    out2 = jax.block_until_ready(map_reshape(map2, patch_size, num_heads))
    ref2 = _reference(map2, patch_size, num_heads)
    assert out2.shape == ref2.shape, (out2.shape, ref2.shape)
    assert jnp.allclose(out2, ref2), "mismatch vs reference (test 2)"

    # Test 3: N = 12 (lane/row UNaligned) — full-dim block, no padding, no slice.
    map3 = jax.random.normal(key, (2, 4, 4, 6), dtype=jnp.float32)
    out3 = jax.block_until_ready(map_reshape(map3, patch_size, num_heads))
    ref3 = _reference(map3, patch_size, num_heads)
    assert out3.shape == ref3.shape, (out3.shape, ref3.shape)
    assert jnp.allclose(out3, ref3), "mismatch vs reference (test 3)"

    print("KERNEL_OK")
</pallas_src>

<mosaic_0001>
module attributes {stable_mosaic.version = 11 : i64} {
  func.func @_broadcast_kernel(%arg0: i32, %arg1: i32, %arg2: memref<1x8x1xf32, #tpu.memory_space<vmem>>, %arg3: memref<1x4x8x8xf32, #tpu.memory_space<vmem>>) attributes {dimension_semantics = [#tpu.dimension_semantics<parallel>, #tpu.dimension_semantics<parallel>], iteration_bounds = array<i64: 2, 1>, scalar_prefetch = 0 : i64, scratch_operands = 0 : i64, tpu.core_type = #tpu.core_type<tc>, window_params = [{transform_indices = @transform_0, window_bounds = array<i64: 1, 8, 1>}, {transform_indices = @transform_1, window_bounds = array<i64: 1, 4, 8, 8>}]} {
    %c0 = arith.constant 0 : index
    %c0_0 = arith.constant 0 : index
    %c0_1 = arith.constant 0 : index
    %0 = vector.load %arg2[%c0, %c0_0, %c0_1] : memref<1x8x1xf32, #tpu.memory_space<vmem>>, vector<1x8x1xf32>
    %1 = vector.shape_cast %0 : vector<1x8x1xf32> to vector<1x1x8x1xf32>
    %2 = vector.shape_cast %1 : vector<1x1x8x1xf32> to vector<1x1x8x1xf32>
    %3 = vector.broadcast %2 : vector<1x1x8x1xf32> to vector<1x4x8x8xf32>
    %c0_2 = arith.constant 0 : index
    %c0_3 = arith.constant 0 : index
    %c0_4 = arith.constant 0 : index
    %c0_5 = arith.constant 0 : index
    %4 = vector.load %arg3[%c0_2, %c0_3, %c0_4, %c0_5] : memref<1x4x8x8xf32, #tpu.memory_space<vmem>>, vector<1x4x8x8xf32>
    tpu.vector_store %arg3[%c0_2, %c0_3, %c0_4, %c0_5], %3 {strides = array<i32>} : memref<1x4x8x8xf32, #tpu.memory_space<vmem>>, vector<1x4x8x8xf32>,
    return
  }
  func.func @transform_0(%arg0: i32, %arg1: i32) -> (i32, i32, i32) {
    %c0_i32 = arith.constant 0 : i32
    %c0_i32_0 = arith.constant 0 : i32
    return %arg0, %arg1, %c0_i32 : i32, i32, i32
  }
  func.func @transform_1(%arg0: i32, %arg1: i32) -> (i32, i32, i32, i32) {
    %c0_i32 = arith.constant 0 : i32
    %c0_i32_0 = arith.constant 0 : i32
    %c0_i32_1 = arith.constant 0 : i32
    return %arg0, %c0_i32, %arg1, %c0_i32_0 : i32, i32, i32, i32
  }
}

</mosaic_0001>

<llo_original>
// kernel: tpu_custom_call.1
$region0: #{tpu_custom_call.1}
  #allocation0 [shape = 'u32[]', space=smem, size = 0x4, offset = 0x4, fixed_abs, tag = 'smem constant byte address 0x4 - core index']
  #allocation1 [shape = 'u32[144,128]{1,0:T(1,128)}', space=vmem, size = 0x12000, scoped, tag = 'internal scratch']
  %s0 = inlined_call_operand.vmem [shape: f32[2,8,1], index: 0, kind: input, shape index: {}]
  %s1 = inlined_call_operand.hbm [shape: f32[2,4,8,8], index: 1, kind: output, shape index: {}]
  %s2 = sld [smem:[#allocation0]]
  $region37: #{tpu_custom_call.1} parent=0
    _
  %s4 = ssub.s32 1, %s2
  %s5 = scalar_select 0, %s4, %s2
  $region1: #{tpu_custom_call.1} parent=0
    #allocation2 [shape = 'u8[32768]{0}', space=vmem, size = 0x8000, scoped, tag = 'output window, operand 0']
    #allocation3 [shape = 's32[2]{0}', space=sflag, size = 0x8, scoped, tag = 'scoped memory for tpu_custom_call.1']
    %6 = vsyncpa [#allocation3], 0
    %s7 = scalar_lea.sflag [#allocation3], 1
    %8 = vsyncpa %s7, 0
    loop: start=0, step=1, limit=4
    $region2: #{tpu_custom_call.1} parent=1 // loop_pre_header
      _
    $region3: #{tpu_custom_call.1} parent=1 // loop_header
      %s10 = sphi 0, %s14
      %p11 = scmp.ge.s32.totalorder %s10, 4
      %s17 = sphi 0, %s29
      %s18 = sphi 0, %s25
      %s19 = sphi 0, %s17
      %s20 = sphi 0, %s18
      %s21 = sphi 0, %s19
      %s22 = sphi 0, %s20
      %s34 = sphi 0, %s36
      %s37 = sphi 0, %s34
      %s38 = sphi 0, %s37
      %s54 = sphi 0, %s38
      %s62 = sphi 0, %s64
      %s65 = sphi 0, %s62
      %s66 = sphi 0, %s65
      %s82 = sphi 0, %s66
    $region4: #{tpu_custom_call.1} parent=1 // loop_header_branch
      %13 = sbr.rel (%p11) target = $region8
    $region5: #{tpu_custom_call.1} parent=1 // loop_body
      %s15 = ssub.s32 %s10, 1
      %s16 = ssub.s32 %s10, 2
      %s23 = sadd.s32 1, %s18
      %p24 = scmp.ge.s32.totalorder %s23, 1
      %s25 = scalar_select %p24, 0, %s23
      %s26 = sadd.s32 1, %s17
      %s27 = scalar_select %p24, %s26, %s17
      %p28 = scmp.ge.s32.totalorder %s27, 2
      %s29 = scalar_select %p28, 0, %s27
      %s30 = ssub.s32 %s17, %s29
      %s31 = ssub.s32 %s18, %s25
      %s32 = sor.u32 %s30, %s31
      %p33 = scmp.eq.s32.totalorder %s32, 0
      %s35 = sadd.s32 %s34, 1
      %s36 = scalar_select %p33, %s34, %s35
      %p39 = pneg %p33
      %p40 = scmp.eq.s32.totalorder %s10, 1
      %p41 = por %p39, %p40
      %p42 = scmp.ne.s32.totalorder %s34, %s37
      %p43 = scmp.eq.s32.totalorder %s10, 0
      %p44 = por %p42, %p43
      %p45 = scmp.ne.s32.totalorder %s34, %s37
      %p46 = scmp.eq.s32.totalorder %s15, 1
      %p47 = por %p45, %p46
      %p48 = scmp.ne.s32.totalorder %s37, %s38
      %p49 = scmp.eq.s32.totalorder %s15, 0
      %p50 = por %p48, %p49
      %p51 = scmp.ne.s32.totalorder %s37, %s38
      %p52 = scmp.eq.s32.totalorder %s16, 1
      %p53 = por %p51, %p52
      %p55 = scmp.ne.s32.totalorder %s38, %s54
      %p56 = scmp.eq.s32.totalorder %s16, 0
      %p57 = por %p55, %p56
      %s58 = ssub.s32 %s17, %s29
      %s59 = ssub.s32 %s18, %s25
      %s60 = sor.u32 %s58, %s59
      %p61 = scmp.eq.s32.totalorder %s60, 0
      %s63 = sadd.s32 %s62, 1
      %s64 = scalar_select %p61, %s62, %s63
      %p67 = pneg %p61
      %p68 = scmp.eq.s32.totalorder %s10, 1
      %p69 = por %p67, %p68
      %p70 = scmp.ne.s32.totalorder %s62, %s65
      %p71 = scmp.eq.s32.totalorder %s10, 0
      %p72 = por %p70, %p71
      %p73 = scmp.ne.s32.totalorder %s62, %s65
      %p74 = scmp.eq.s32.totalorder %s15, 1
      %p75 = por %p73, %p74
      %p76 = scmp.ne.s32.totalorder %s65, %s66
      %p77 = scmp.eq.s32.totalorder %s15, 0
      %p78 = por %p76, %p77
      %p79 = scmp.ne.s32.totalorder %s65, %s66
      %p80 = scmp.eq.s32.totalorder %s16, 1
      %p81 = por %p79, %p80
      %p83 = scmp.ne.s32.totalorder %s66, %s82
      %p84 = scmp.eq.s32.totalorder %s16, 0
      %p85 = por %p83, %p84
      %p86 = scmp.le.s32.totalorder 1, %s10
      %p87 = scmp.lt.s32.totalorder %s10, 3
      %p88 = pnand %p86, %p87
      %p89 = pneg %p88
      // Predicated region
      $region9: #{tpu_custom_call.1} parent=5 // pred_check
        _
      $region10: #{tpu_custom_call.1} parent=5 // pred_check_branch
        %91 = sbr.rel (%p88) target = $region12
      $region11: #{tpu_custom_call.1} parent=5 // pred_region
        %s92 = ssub.s32 %s10, 1
      $region12: #{tpu_custom_call.1} parent=5 // pred_fallthru
        _
      %p93 = scmp.lt.s32.totalorder %s10, 2
      // Predicated region
      $region13: #{tpu_custom_call.1} parent=5 // pred_check
        %p94 = pneg %p93
      $region14: #{tpu_custom_call.1} parent=5 // pred_check_branch
        %96 = sbr.rel (%p94) target = $region16
      $region15: #{tpu_custom_call.1} parent=5 // pred_region
        // Predicated region
        $region17: #{tpu_custom_call.1} parent=15 // pred_check
          %p97 = pneg %p44
        $region18: #{tpu_custom_call.1} parent=15 // pred_check_branch
          %99 = sbr.rel (%p97) target = $region20
        $region19: #{tpu_custom_call.1} parent=15 // pred_region
          %p100 = scmp.lt.s32.totalorder %s17, 1
          %s101 = scalar_select %p100, %s17, 1
          %p102 = scmp.lt.s32.totalorder %s18, 0
          %s103 = scalar_select %p102, %s18, 0
          %s104 = sadd.s32 %s103, %s101
          %s105 = smul.addr %s104, 8
          %s106 = scalar_lea.vmem %s0, %s105
        $region20: #{tpu_custom_call.1} parent=15 // pred_fallthru
          _
      $region16: #{tpu_custom_call.1} parent=5 // pred_fallthru
        _
      %p107 = scmp.le.s32.totalorder 1, %s10
      %p108 = scmp.lt.s32.totalorder %s10, 3
      %p109 = pnand %p107, %p108
      %p110 = pneg %p109
      // Predicated region
      $region21: #{tpu_custom_call.1} parent=5 // pred_check
        _
      $region22: #{tpu_custom_call.1} parent=5 // pred_check_branch
        %112 = sbr.rel (%p109) target = $region24
      $region23: #{tpu_custom_call.1} parent=5 // pred_region
        %s113 = ssub.s32 %s10, 1
        %p114 = scmp.lt.s32.totalorder %s19, 1
        %s115 = scalar_select %p114, %s19, 1
        %p116 = scmp.lt.s32.totalorder %s20, 0
        %s117 = scalar_select %p116, %s20, 0
        %s118 = sadd.s32 %s117, %s115
        %s119 = smul.addr %s118, 8
        %s120 = scalar_lea.vmem %s0, %s119
        %p121 = pneg %p50
        %p122 = pneg %p47
        %p123 = pneg %p78
        %p124 = pneg %p75
        %s125 = sand.u32 %s65, 1
        %s126 = scalar_lea.sflag [#allocation3], %s125
        %s127 = sand.u32 %s65, 1
        %s128 = smul.addr %s127, 32
        %s129 = scalar_lea.vmem [#allocation2], %s128
        %p130 = scmp.lt.s32.totalorder %s19, 1
        %s131 = scalar_select %p130, %s19, 1
        %p132 = scmp.lt.s32.totalorder %s20, 0
        %s133 = scalar_select %p132, %s20, 0
        %s134 = sadd.s32 %s133, %s131
        %s135 = smul.addr %s134, 8
        %s136 = scalar_lea.vmem %s0, %s135
        %v137 = vld [vmem:[%s136] sm:$0xff]
        %139 = vset.pattern.permute.xlu0 0
        %140 = vperm.xlu0 %139, %v137
        %v141 = vpop.permute.xlu0 %140
        %vm143 = vcmask 64512
        %144 = vst.msk [vmem:[%s129] sm:$0xff] %vm143, %v141
        %145 = vst.msk [vmem:[%s129 + $0x8] sm:$0xff] %vm143, %v141
        %146 = vst.msk [vmem:[%s129 + $0x10] sm:$0xff] %vm143, %v141
        %147 = vst.msk [vmem:[%s129 + $0x18] sm:$0xff] %vm143, %v141
        %s148 = sand.u32 %s65, 1
        %s149 = scalar_lea.sflag [#allocation3], %s148
        %s150 = sand.u32 %s65, 1
        %s151 = smul.addr %s150, 32
        %s152 = scalar_lea.vmem [#allocation2], %s151
        // Predicated region
        $region25: #{tpu_custom_call.1} parent=23 // pred_check
          %p153 = pneg %p75
        $region26: #{tpu_custom_call.1} parent=23 // pred_check_branch
          %155 = sbr.rel (%p153) target = $region28
        $region27: #{tpu_custom_call.1} parent=23 // pred_region
          %s157 = ssub.s32 512, 512
          %158 = vsyncadd %s149, %s157
          %s159 = smul.addr %s19, 4
          %s160 = sadd.s32 %s20, %s159
          %s161 = smul.addr %s160, 128
          %s162 = scalar_lea.hbm %s1, %s161
          %s163 = sshll.u32 %s152, 4
          %s164 = int_to_ptr.vmem [resolvable:$true] %s163
          %169 = dma.vmem_to_hbm [thread:$0]  %s164, 512, %s162, %s149, 128, 128, 8
        $region28: #{tpu_custom_call.1} parent=23 // pred_fallthru
          _
      $region24: #{tpu_custom_call.1} parent=5 // pred_fallthru
        _
      %p170 = scmp.le.s32.totalorder 2, %s10
      // Predicated region
      $region29: #{tpu_custom_call.1} parent=5 // pred_check
        %p171 = pneg %p170
      $region30: #{tpu_custom_call.1} parent=5 // pred_check_branch
        %173 = sbr.rel (%p171) target = $region32
      $region31: #{tpu_custom_call.1} parent=5 // pred_region
        %s174 = ssub.s32 %s10, 2
        // Predicated region
        $region33: #{tpu_custom_call.1} parent=31 // pred_check
          %p175 = pneg %p81
        $region34: #{tpu_custom_call.1} parent=31 // pred_check_branch
          %177 = sbr.rel (%p175) target = $region36
        $region35: #{tpu_custom_call.1} parent=31 // pred_region
          %s178 = sand.u32 %s66, 1
          %s179 = scalar_lea.sflag [#allocation3], %s178
          %s180 = sand.u32 %s66, 1
          %s181 = smul.addr %s180, 32
          %s182 = scalar_lea.vmem [#allocation2], %s181
          %183 = dma.done %s179, 512
        $region36: #{tpu_custom_call.1} parent=31 // pred_fallthru
          _
      $region32: #{tpu_custom_call.1} parent=5 // pred_fallthru
        _
    $region6: #{tpu_custom_call.1} parent=1 // loop_footer
      %s14 = sadd.s32 1, %s10
    $region7: #{tpu_custom_call.1} parent=1 // loop_footer_branch
      %9 = sbr.rel target = $region3
    $region8: #{tpu_custom_call.1} parent=1 // loop_exit
      _
    %184 = vsyncpa [#allocation3], 1
    %s185 = scalar_lea.sflag [#allocation3], 1
    %186 = vsyncpa %s185, 1

</llo_original>
